<compile_context>
chip_gen: v7x
topology: tpu7x:2x2x1
jax: 0.10.0
libtpu: 0.0.40
codegen_flags: <defaults>
</compile_context>

<pallas_src>
import functools

import jax
import jax.numpy as jnp
from jax.experimental import pallas as pl
from jax.experimental.pallas import tpu as pltpu


def _set_encoder_kernel(num_words, emb_ref, mask_ref, wah_ref, wax_ref, ba_ref,
                        wg_ref, b_ref, h_out_ref, c_out_ref):
    emb = emb_ref[...]          # (TB, S, H)
    mask = mask_ref[...]        # (TB, S)
    wah = wah_ref[...]          # (1, H)   attn weight cols acting on the hidden half
    wax = wax_ref[...]          # (1, H)   attn weight cols acting on the input half
    ba = ba_ref[...]            # (1, 1)   attn bias
    w_gates = wg_ref[...]       # (2H, 4H) fused [W_ih^T ; W_hh^T], cols ordered [i,f,o,g]
    b = b_ref[...]              # (1, 4H)  fused bias, cols ordered [i,f,o,g]

    TB, S, H = emb.shape

    # ---- loop invariants (hoisted out of the recurrence) ----
    # Input-dependent half of the attention logit + bias: time-invariant.
    x_logit = jnp.sum(emb * wax[None, :, :], axis=-1) + ba       # (TB, S)
    # Mask folded into the value tensor once (sigmoid(l)*mask applied to emb).
    emb_masked = mask[:, :, None] * emb                          # (TB, S, H)
    # Hoisted broadcasts (JAX does not CSE broadcast_in_dim inside loops).
    wah_b = jnp.broadcast_to(wah, (TB, H))                       # (TB, H)
    b_b = jnp.broadcast_to(b, (TB, 4 * H))                       # (TB, 4H)

    h0 = jnp.zeros((TB, H), jnp.float32)                         # init_hidden (zeros)
    c0 = jnp.zeros((TB, H), jnp.float32)                         # init_cell (zeros)

    def step(_, carry):
        h, c = carry
        # Attn: sigmoid(Linear(cat(hidden, whole_input))) * mask, then weighted sum.
        h_score = jnp.sum(h * wah_b, axis=-1, keepdims=True)     # (TB, 1)
        a = jax.nn.sigmoid(h_score + x_logit)                    # (TB, S)
        r = jnp.sum(a[:, :, None] * emb_masked, axis=1)          # (TB, H)
        # LSTMCell with a single fused gate matmul.
        rh = jnp.concatenate([r, h], axis=1)                     # (TB, 2H)
        gates = jnp.dot(rh, w_gates,
                        preferred_element_type=jnp.float32) + b_b  # (TB, 4H) [i|f|o|g]
        sig = jax.nn.sigmoid(gates[:, :3 * H])                   # one EUP launch: i,f,o
        g = jnp.tanh(gates[:, 3 * H:])                           # one EUP launch: g
        i = sig[:, 0:H]
        f = sig[:, H:2 * H]
        o = sig[:, 2 * H:3 * H]
        c_new = f * c + i * g
        h_new = o * jnp.tanh(c_new)
        return h_new, c_new

    # num_words is a static Python int -> fully unrolled so the LLO scheduler can
    # overlap independent work across iterations.
    h_f, c_f = jax.lax.fori_loop(0, num_words, step, (h0, c0), unroll=True)
    h_out_ref[...] = h_f
    c_out_ref[...] = c_f


def _reorder_gates_rows(w, H):
    """Reorder PyTorch LSTM gate blocks (rows) from [i, f, g, o] to [i, f, o, g]."""
    return jnp.concatenate([w[0:H], w[H:2 * H], w[3 * H:4 * H], w[2 * H:3 * H]], axis=0)


def set_encoder_forward(embedded_input, input_mask, params, num_words):
    """embedded_input: (B, S, H) f32; input_mask: (S, B). Returns (last_hidden, last_cell)."""
    B, S, H = embedded_input.shape
    mask_bs = jnp.transpose(input_mask, (1, 0)).astype(embedded_input.dtype)   # (B, S)

    # attn.weight is (1, 2H): first H columns hit the (expanded) hidden, last H hit the input.
    wah = params["w_attn"][:, :H]                              # (1, H)
    wax = params["w_attn"][:, H:]                              # (1, H)
    ba = params["b_attn"].reshape(1, 1)                        # (1, 1)

    # Fused gate weight: rows reordered to [i, f, o, g], then stacked [W_ih^T ; W_hh^T].
    w_ih_r = _reorder_gates_rows(params["w_ih"], H)            # (4H, H)
    w_hh_r = _reorder_gates_rows(params["w_hh"], H)            # (4H, H)
    w_gates = jnp.concatenate([w_ih_r.T, w_hh_r.T], axis=0)    # (2H, 4H)
    b_fused = _reorder_gates_rows(
        (params["b_ih"] + params["b_hh"]).reshape(4 * H, 1), H).reshape(1, 4 * H)  # (1, 4H)

    # Batch grid: block the batch (other dims stay full-extent, satisfying the (8,128)
    # rule).  "parallel" lets v7x's two TensorCores split the batch; emb/mask blocks are
    # auto double-buffered from HBM for large B.
    TB = 8 if B % 8 == 0 else B
    grid = (pl.cdiv(B, TB),)

    kernel = functools.partial(_set_encoder_kernel, num_words)
    h, c = pl.pallas_call(
        kernel,
        out_shape=(jax.ShapeDtypeStruct((B, H), jnp.float32),
                   jax.ShapeDtypeStruct((B, H), jnp.float32)),
        grid=grid,
        in_specs=[
            pl.BlockSpec((TB, S, H), lambda i: (i, 0, 0)),        # embedded_input
            pl.BlockSpec((TB, S), lambda i: (i, 0)),              # mask (B, S)
            pl.BlockSpec((1, H), lambda i: (0, 0)),               # wah
            pl.BlockSpec((1, H), lambda i: (0, 0)),               # wax
            pl.BlockSpec((1, 1), lambda i: (0, 0)),               # attn bias
            pl.BlockSpec((2 * H, 4 * H), lambda i: (0, 0)),       # fused gate weight
            pl.BlockSpec((1, 4 * H), lambda i: (0, 0)),           # fused gate bias
        ],
        out_specs=(pl.BlockSpec((TB, H), lambda i: (i, 0)),
                   pl.BlockSpec((TB, H), lambda i: (i, 0))),
        compiler_params=pltpu.CompilerParams(
            dimension_semantics=("parallel",),
            vmem_limit_bytes=32 * 1024 * 1024,   # safe on v5e (16 MiB default) and v7x (64 MiB phys)
        ),
    )(embedded_input, mask_bs, wah, wax, ba, w_gates, b_fused)
    return h, c


def set_encoder_reference(embedded_input, input_mask, params, num_words):
    """Pure-JAX reference mirroring the PyTorch forward, for correctness check."""
    B, S, H = embedded_input.shape
    mask_bs = jnp.transpose(input_mask, (1, 0)).astype(embedded_input.dtype)
    h = jnp.zeros((B, H), jnp.float32)
    c = jnp.zeros((B, H), jnp.float32)
    for _ in range(num_words):
        hid_exp = jnp.broadcast_to(h[:, None, :], (B, S, H))
        cat = jnp.concatenate([hid_exp, embedded_input], axis=2)          # (B, S, 2H)
        aw = jax.nn.sigmoid(cat @ params["w_attn"].T + params["b_attn"])  # (B, S, 1)
        aw = mask_bs[:, :, None] * aw
        aw = jnp.transpose(aw, (0, 2, 1))                                 # (B, 1, S)
        r = jnp.einsum("bos,bsh->boh", aw, embedded_input)[:, 0, :]       # (B, H)
        gates = (r @ params["w_ih"].T + params["b_ih"]
                 + h @ params["w_hh"].T + params["b_hh"])
        i, f, g, o = jnp.split(gates, 4, axis=1)
        c = jax.nn.sigmoid(f) * c + jax.nn.sigmoid(i) * jnp.tanh(g)
        h = jax.nn.sigmoid(o) * jnp.tanh(c)
    return h, c


def init_params(key, hidden_size):
    """Deterministic synthetic parameters matching the PyTorch module's shapes."""
    H = hidden_size
    ks = jax.random.split(key, 6)
    s_attn = 1.0 / jnp.sqrt(2.0 * H)
    s_lstm = 1.0 / jnp.sqrt(1.0 * H)
    return {
        "w_attn": jax.random.uniform(ks[0], (1, 2 * H), jnp.float32, -s_attn, s_attn),
        "b_attn": jax.random.uniform(ks[1], (1,), jnp.float32, -s_attn, s_attn),
        "w_ih":   jax.random.uniform(ks[2], (4 * H, H), jnp.float32, -s_lstm, s_lstm),
        "w_hh":   jax.random.uniform(ks[3], (4 * H, H), jnp.float32, -s_lstm, s_lstm),
        "b_ih":   jax.random.uniform(ks[4], (4 * H,), jnp.float32, -s_lstm, s_lstm),
        "b_hh":   jax.random.uniform(ks[5], (4 * H,), jnp.float32, -s_lstm, s_lstm),
    }


if __name__ == "__main__":
    B, S, H = 2, 8, 32
    NUM_WORDS = 6  # args.num_words

    key = jax.random.PRNGKey(0)
    k_emb, k_mask, k_param = jax.random.split(key, 3)

    embedded_input = jax.random.normal(k_emb, (B, S, H), jnp.float32)
    # input_mask is (seq, batch) as implied by input_mask.transpose(0, 1) in Attn.forward
    input_mask = (jax.random.uniform(k_mask, (S, B)) > 0.3).astype(jnp.float32)
    params = init_params(k_param, H)

    h_out, c_out = set_encoder_forward(embedded_input, input_mask, params, NUM_WORDS)
    jax.block_until_ready((h_out, c_out))

    h_ref, c_ref = set_encoder_reference(embedded_input, input_mask, params, NUM_WORDS)
    assert h_out.shape == (B, H) and c_out.shape == (B, H)
    assert jnp.allclose(h_out, h_ref, rtol=1e-5, atol=1e-5)
    assert jnp.allclose(c_out, c_ref, rtol=1e-5, atol=1e-5)

    print("KERNEL_OK")
</pallas_src>

<mosaic_0001>
module attributes {stable_mosaic.version = 11 : i64} {
  func.func @_set_encoder_kernel(%arg0: i32, %arg1: memref<2x8x32xf32, #tpu.memory_space<vmem>>, %arg2: memref<2x8xf32, #tpu.memory_space<vmem>>, %arg3: memref<1x32xf32, #tpu.memory_space<vmem>>, %arg4: memref<1x32xf32, #tpu.memory_space<vmem>>, %arg5: memref<1x1xf32, #tpu.memory_space<vmem>>, %arg6: memref<64x128xf32, #tpu.memory_space<vmem>>, %arg7: memref<1x128xf32, #tpu.memory_space<vmem>>, %arg8: memref<2x32xf32, #tpu.memory_space<vmem>>, %arg9: memref<2x32xf32, #tpu.memory_space<vmem>>) attributes {dimension_semantics = [#tpu.dimension_semantics<parallel>], iteration_bounds = array<i64: 1>, scalar_prefetch = 0 : i64, scratch_operands = 0 : i64, tpu.core_type = #tpu.core_type<tc>, window_params = [{transform_indices = @transform_0, window_bounds = array<i64: 2, 8, 32>}, {transform_indices = @transform_1, window_bounds = array<i64: 2, 8>}, {pipeline_mode = #tpu.pipeline_mode<synchronous>, transform_indices = @transform_2, window_bounds = array<i64: 1, 32>}, {pipeline_mode = #tpu.pipeline_mode<synchronous>, transform_indices = @transform_3, window_bounds = array<i64: 1, 32>}, {pipeline_mode = #tpu.pipeline_mode<synchronous>, transform_indices = @transform_4, window_bounds = array<i64: 1, 1>}, {pipeline_mode = #tpu.pipeline_mode<synchronous>, transform_indices = @transform_5, window_bounds = array<i64: 64, 128>}, {pipeline_mode = #tpu.pipeline_mode<synchronous>, transform_indices = @transform_6, window_bounds = array<i64: 1, 128>}, {transform_indices = @transform_7, window_bounds = array<i64: 2, 32>}, {transform_indices = @transform_8, window_bounds = array<i64: 2, 32>}]} {
    %c0 = arith.constant 0 : index
    %c0_0 = arith.constant 0 : index
    %c0_1 = arith.constant 0 : index
    %0 = vector.load %arg1[%c0, %c0_0, %c0_1] : memref<2x8x32xf32, #tpu.memory_space<vmem>>, vector<2x8x32xf32>
    %c0_2 = arith.constant 0 : index
    %c0_3 = arith.constant 0 : index
    %1 = vector.load %arg2[%c0_2, %c0_3] : memref<2x8xf32, #tpu.memory_space<vmem>>, vector<2x8xf32>
    %c0_4 = arith.constant 0 : index
    %c0_5 = arith.constant 0 : index
    %2 = vector.load %arg3[%c0_4, %c0_5] : memref<1x32xf32, #tpu.memory_space<vmem>>, vector<1x32xf32>
    %c0_6 = arith.constant 0 : index
    %c0_7 = arith.constant 0 : index
    %3 = vector.load %arg4[%c0_6, %c0_7] : memref<1x32xf32, #tpu.memory_space<vmem>>, vector<1x32xf32>
    %c0_8 = arith.constant 0 : index
    %c0_9 = arith.constant 0 : index
    %4 = vector.load %arg5[%c0_8, %c0_9] : memref<1x1xf32, #tpu.memory_space<vmem>>, vector<1x1xf32>
    %c0_10 = arith.constant 0 : index
    %c0_11 = arith.constant 0 : index
    %5 = vector.load %arg6[%c0_10, %c0_11] : memref<64x128xf32, #tpu.memory_space<vmem>>, vector<64x128xf32>
    %c0_12 = arith.constant 0 : index
    %c0_13 = arith.constant 0 : index
    %6 = vector.load %arg7[%c0_12, %c0_13] : memref<1x128xf32, #tpu.memory_space<vmem>>, vector<1x128xf32>
    %7 = vector.shape_cast %3 : vector<1x32xf32> to vector<1x1x32xf32>
    %8 = vector.broadcast %7 : vector<1x1x32xf32> to vector<2x8x32xf32>
    %9 = arith.mulf %0, %8 : vector<2x8x32xf32>
    %cst = arith.constant dense<0.000000e+00> : vector<2x8xf32>
    %10 = vector.multi_reduction <add>, %9, %cst [2] : vector<2x8x32xf32> to vector<2x8xf32>
    %11 = vector.broadcast %4 : vector<1x1xf32> to vector<2x8xf32>
    %12 = arith.addf %10, %11 : vector<2x8xf32>
    %13 = vector.shape_cast %1 : vector<2x8xf32> to vector<2x8x1xf32>
    %14 = vector.broadcast %13 : vector<2x8x1xf32> to vector<2x8x32xf32>
    %15 = arith.mulf %14, %0 : vector<2x8x32xf32>
    %16 = vector.shape_cast %2 : vector<1x32xf32> to vector<1x32xf32>
    %17 = vector.broadcast %16 : vector<1x32xf32> to vector<2x32xf32>
    %18 = vector.shape_cast %6 : vector<1x128xf32> to vector<1x128xf32>
    %19 = vector.broadcast %18 : vector<1x128xf32> to vector<2x128xf32>
    %cst_14 = arith.constant 0.000000e+00 : f32
    %20 = vector.broadcast %cst_14 : f32 to vector<2x32xf32>
    %cst_15 = arith.constant 0.000000e+00 : f32
    %21 = vector.broadcast %cst_15 : f32 to vector<2x32xf32>
    %c0_i32 = arith.constant 0 : i32
    %22 = arith.mulf %20, %17 : vector<2x32xf32>
    %cst_16 = arith.constant dense<0.000000e+00> : vector<2xf32>
    %23 = vector.multi_reduction <add>, %22, %cst_16 [1] : vector<2x32xf32> to vector<2xf32>
    %24 = vector.shape_cast %23 : vector<2xf32> to vector<2x1xf32>
    %25 = vector.broadcast %24 : vector<2x1xf32> to vector<2x8xf32>
    %26 = arith.addf %25, %12 : vector<2x8xf32>
    %27 = arith.negf %26 : vector<2x8xf32>
    %28 = math.exp %27 : vector<2x8xf32>
    %cst_17 = arith.constant 1.000000e+00 : f32
    %29 = vector.broadcast %cst_17 : f32 to vector<2x8xf32>
    %30 = arith.addf %29, %28 : vector<2x8xf32>
    %31 = arith.divf %29, %30 : vector<2x8xf32>
    %32 = vector.shape_cast %31 : vector<2x8xf32> to vector<2x8x1xf32>
    %33 = vector.broadcast %32 : vector<2x8x1xf32> to vector<2x8x32xf32>
    %34 = arith.mulf %33, %15 : vector<2x8x32xf32>
    %cst_18 = arith.constant dense<0.000000e+00> : vector<2x32xf32>
    %35 = vector.multi_reduction <add>, %34, %cst_18 [1] : vector<2x8x32xf32> to vector<2x32xf32>
    %36 = tpu.concatenate %35, %20 in 1 : vector<2x32xf32>, vector<2x32xf32> -> vector<2x64xf32>
    %cst_19 = arith.constant dense<0.000000e+00> : vector<2x128xf32>
    %37 = tpu.matmul %36, %5, %cst_19 {dimension_numbers = #tpu.dot_dimension_numbers<[1], [0], [0], [1], [0, 0, 1, 1], [], []>} : vector<2x64xf32>, vector<64x128xf32>, vector<2x128xf32> -> vector<2x128xf32>
    %38 = arith.addf %37, %19 : vector<2x128xf32>
    %39 = vector.extract_strided_slice %38 {offsets = [0, 0], sizes = [2, 96], strides = [1, 1]} : vector<2x128xf32> to vector<2x96xf32>
    %40 = arith.negf %39 : vector<2x96xf32>
    %41 = math.exp %40 : vector<2x96xf32>
    %cst_20 = arith.constant 1.000000e+00 : f32
    %42 = vector.broadcast %cst_20 : f32 to vector<2x96xf32>
    %43 = arith.addf %42, %41 : vector<2x96xf32>
    %44 = arith.divf %42, %43 : vector<2x96xf32>
    %45 = vector.extract_strided_slice %38 {offsets = [0, 96], sizes = [2, 32], strides = [1, 1]} : vector<2x128xf32> to vector<2x32xf32>
    %46 = math.tanh %45 : vector<2x32xf32>
    %47 = vector.extract_strided_slice %44 {offsets = [0, 0], sizes = [2, 32], strides = [1, 1]} : vector<2x96xf32> to vector<2x32xf32>
    %48 = vector.extract_strided_slice %44 {offsets = [0, 32], sizes = [2, 32], strides = [1, 1]} : vector<2x96xf32> to vector<2x32xf32>
    %49 = vector.extract_strided_slice %44 {offsets = [0, 64], sizes = [2, 32], strides = [1, 1]} : vector<2x96xf32> to vector<2x32xf32>
    %50 = arith.mulf %48, %21 : vector<2x32xf32>
    %51 = arith.mulf %47, %46 : vector<2x32xf32>
    %52 = arith.addf %50, %51 : vector<2x32xf32>
    %53 = math.tanh %52 : vector<2x32xf32>
    %54 = arith.mulf %49, %53 : vector<2x32xf32>
    %c1_i32 = arith.constant 1 : i32
    %55 = arith.mulf %54, %17 : vector<2x32xf32>
    %cst_21 = arith.constant dense<0.000000e+00> : vector<2xf32>
    %56 = vector.multi_reduction <add>, %55, %cst_21 [1] : vector<2x32xf32> to vector<2xf32>
    %57 = vector.shape_cast %56 : vector<2xf32> to vector<2x1xf32>
    %58 = vector.broadcast %57 : vector<2x1xf32> to vector<2x8xf32>
    %59 = arith.addf %58, %12 : vector<2x8xf32>
    %60 = arith.negf %59 : vector<2x8xf32>
    %61 = math.exp %60 : vector<2x8xf32>
    %cst_22 = arith.constant 1.000000e+00 : f32
    %62 = vector.broadcast %cst_22 : f32 to vector<2x8xf32>
    %63 = arith.addf %62, %61 : vector<2x8xf32>
    %64 = arith.divf %62, %63 : vector<2x8xf32>
    %65 = vector.shape_cast %64 : vector<2x8xf32> to vector<2x8x1xf32>
    %66 = vector.broadcast %65 : vector<2x8x1xf32> to vector<2x8x32xf32>
    %67 = arith.mulf %66, %15 : vector<2x8x32xf32>
    %cst_23 = arith.constant dense<0.000000e+00> : vector<2x32xf32>
    %68 = vector.multi_reduction <add>, %67, %cst_23 [1] : vector<2x8x32xf32> to vector<2x32xf32>
    %69 = tpu.concatenate %68, %54 in 1 : vector<2x32xf32>, vector<2x32xf32> -> vector<2x64xf32>
    %cst_24 = arith.constant dense<0.000000e+00> : vector<2x128xf32>
    %70 = tpu.matmul %69, %5, %cst_24 {dimension_numbers = #tpu.dot_dimension_numbers<[1], [0], [0], [1], [0, 0, 1, 1], [], []>} : vector<2x64xf32>, vector<64x128xf32>, vector<2x128xf32> -> vector<2x128xf32>
    %71 = arith.addf %70, %19 : vector<2x128xf32>
    %72 = vector.extract_strided_slice %71 {offsets = [0, 0], sizes = [2, 96], strides = [1, 1]} : vector<2x128xf32> to vector<2x96xf32>
    %73 = arith.negf %72 : vector<2x96xf32>
    %74 = math.exp %73 : vector<2x96xf32>
    %cst_25 = arith.constant 1.000000e+00 : f32
    %75 = vector.broadcast %cst_25 : f32 to vector<2x96xf32>
    %76 = arith.addf %75, %74 : vector<2x96xf32>
    %77 = arith.divf %75, %76 : vector<2x96xf32>
    %78 = vector.extract_strided_slice %71 {offsets = [0, 96], sizes = [2, 32], strides = [1, 1]} : vector<2x128xf32> to vector<2x32xf32>
    %79 = math.tanh %78 : vector<2x32xf32>
    %80 = vector.extract_strided_slice %77 {offsets = [0, 0], sizes = [2, 32], strides = [1, 1]} : vector<2x96xf32> to vector<2x32xf32>
    %81 = vector.extract_strided_slice %77 {offsets = [0, 32], sizes = [2, 32], strides = [1, 1]} : vector<2x96xf32> to vector<2x32xf32>
    %82 = vector.extract_strided_slice %77 {offsets = [0, 64], sizes = [2, 32], strides = [1, 1]} : vector<2x96xf32> to vector<2x32xf32>
    %83 = arith.mulf %81, %52 : vector<2x32xf32>
    %84 = arith.mulf %80, %79 : vector<2x32xf32>
    %85 = arith.addf %83, %84 : vector<2x32xf32>
    %86 = math.tanh %85 : vector<2x32xf32>
    %87 = arith.mulf %82, %86 : vector<2x32xf32>
    %c2_i32 = arith.constant 2 : i32
    %88 = arith.mulf %87, %17 : vector<2x32xf32>
    %cst_26 = arith.constant dense<0.000000e+00> : vector<2xf32>
    %89 = vector.multi_reduction <add>, %88, %cst_26 [1] : vector<2x32xf32> to vector<2xf32>
    %90 = vector.shape_cast %89 : vector<2xf32> to vector<2x1xf32>
    %91 = vector.broadcast %90 : vector<2x1xf32> to vector<2x8xf32>
    %92 = arith.addf %91, %12 : vector<2x8xf32>
    %93 = arith.negf %92 : vector<2x8xf32>
    %94 = math.exp %93 : vector<2x8xf32>
    %cst_27 = arith.constant 1.000000e+00 : f32
    %95 = vector.broadcast %cst_27 : f32 to vector<2x8xf32>
    %96 = arith.addf %95, %94 : vector<2x8xf32>
    %97 = arith.divf %95, %96 : vector<2x8xf32>
    %98 = vector.shape_cast %97 : vector<2x8xf32> to vector<2x8x1xf32>
    %99 = vector.broadcast %98 : vector<2x8x1xf32> to vector<2x8x32xf32>
    %100 = arith.mulf %99, %15 : vector<2x8x32xf32>
    %cst_28 = arith.constant dense<0.000000e+00> : vector<2x32xf32>
    %101 = vector.multi_reduction <add>, %100, %cst_28 [1] : vector<2x8x32xf32> to vector<2x32xf32>
    %102 = tpu.concatenate %101, %87 in 1 : vector<2x32xf32>, vector<2x32xf32> -> vector<2x64xf32>
    %cst_29 = arith.constant dense<0.000000e+00> : vector<2x128xf32>
    %103 = tpu.matmul %102, %5, %cst_29 {dimension_numbers = #tpu.dot_dimension_numbers<[1], [0], [0], [1], [0, 0, 1, 1], [], []>} : vector<2x64xf32>, vector<64x128xf32>, vector<2x128xf32> -> vector<2x128xf32>
    %104 = arith.addf %103, %19 : vector<2x128xf32>
    %105 = vector.extract_strided_slice %104 {offsets = [0, 0], sizes = [2, 96], strides = [1, 1]} : vector<2x128xf32> to vector<2x96xf32>
    %106 = arith.negf %105 : vector<2x96xf32>
    %107 = math.exp %106 : vector<2x96xf32>
    %cst_30 = arith.constant 1.000000e+00 : f32
    %108 = vector.broadcast %cst_30 : f32 to vector<2x96xf32>
    %109 = arith.addf %108, %107 : vector<2x96xf32>
    %110 = arith.divf %108, %109 : vector<2x96xf32>
    %111 = vector.extract_strided_slice %104 {offsets = [0, 96], sizes = [2, 32], strides = [1, 1]} : vector<2x128xf32> to vector<2x32xf32>
    %112 = math.tanh %111 : vector<2x32xf32>
    %113 = vector.extract_strided_slice %110 {offsets = [0, 0], sizes = [2, 32], strides = [1, 1]} : vector<2x96xf32> to vector<2x32xf32>
    %114 = vector.extract_strided_slice %110 {offsets = [0, 32], sizes = [2, 32], strides = [1, 1]} : vector<2x96xf32> to vector<2x32xf32>
    %115 = vector.extract_strided_slice %110 {offsets = [0, 64], sizes = [2, 32], strides = [1, 1]} : vector<2x96xf32> to vector<2x32xf32>
    %116 = arith.mulf %114, %85 : vector<2x32xf32>
    %117 = arith.mulf %113, %112 : vector<2x32xf32>
    %118 = arith.addf %116, %117 : vector<2x32xf32>
    %119 = math.tanh %118 : vector<2x32xf32>
    %120 = arith.mulf %115, %119 : vector<2x32xf32>
    %c3_i32 = arith.constant 3 : i32
    %121 = arith.mulf %120, %17 : vector<2x32xf32>
    %cst_31 = arith.constant dense<0.000000e+00> : vector<2xf32>
    %122 = vector.multi_reduction <add>, %121, %cst_31 [1] : vector<2x32xf32> to vector<2xf32>
    %123 = vector.shape_cast %122 : vector<2xf32> to vector<2x1xf32>
    %124 = vector.broadcast %123 : vector<2x1xf32> to vector<2x8xf32>
    %125 = arith.addf %124, %12 : vector<2x8xf32>
    %126 = arith.negf %125 : vector<2x8xf32>
    %127 = math.exp %126 : vector<2x8xf32>
    %cst_32 = arith.constant 1.000000e+00 : f32
    %128 = vector.broadcast %cst_32 : f32 to vector<2x8xf32>
    %129 = arith.addf %128, %127 : vector<2x8xf32>
    %130 = arith.divf %128, %129 : vector<2x8xf32>
    %131 = vector.shape_cast %130 : vector<2x8xf32> to vector<2x8x1xf32>
    %132 = vector.broadcast %131 : vector<2x8x1xf32> to vector<2x8x32xf32>
    %133 = arith.mulf %132, %15 : vector<2x8x32xf32>
    %cst_33 = arith.constant dense<0.000000e+00> : vector<2x32xf32>
    %134 = vector.multi_reduction <add>, %133, %cst_33 [1] : vector<2x8x32xf32> to vector<2x32xf32>
    %135 = tpu.concatenate %134, %120 in 1 : vector<2x32xf32>, vector<2x32xf32> -> vector<2x64xf32>
    %cst_34 = arith.constant dense<0.000000e+00> : vector<2x128xf32>
    %136 = tpu.matmul %135, %5, %cst_34 {dimension_numbers = #tpu.dot_dimension_numbers<[1], [0], [0], [1], [0, 0, 1, 1], [], []>} : vector<2x64xf32>, vector<64x128xf32>, vector<2x128xf32> -> vector<2x128xf32>
    %137 = arith.addf %136, %19 : vector<2x128xf32>
    %138 = vector.extract_strided_slice %137 {offsets = [0, 0], sizes = [2, 96], strides = [1, 1]} : vector<2x128xf32> to vector<2x96xf32>
    %139 = arith.negf %138 : vector<2x96xf32>
    %140 = math.exp %139 : vector<2x96xf32>
    %cst_35 = arith.constant 1.000000e+00 : f32
    %141 = vector.broadcast %cst_35 : f32 to vector<2x96xf32>
    %142 = arith.addf %141, %140 : vector<2x96xf32>
    %143 = arith.divf %141, %142 : vector<2x96xf32>
    %144 = vector.extract_strided_slice %137 {offsets = [0, 96], sizes = [2, 32], strides = [1, 1]} : vector<2x128xf32> to vector<2x32xf32>
    %145 = math.tanh %144 : vector<2x32xf32>
    %146 = vector.extract_strided_slice %143 {offsets = [0, 0], sizes = [2, 32], strides = [1, 1]} : vector<2x96xf32> to vector<2x32xf32>
    %147 = vector.extract_strided_slice %143 {offsets = [0, 32], sizes = [2, 32], strides = [1, 1]} : vector<2x96xf32> to vector<2x32xf32>
    %148 = vector.extract_strided_slice %143 {offsets = [0, 64], sizes = [2, 32], strides = [1, 1]} : vector<2x96xf32> to vector<2x32xf32>
    %149 = arith.mulf %147, %118 : vector<2x32xf32>
    %150 = arith.mulf %146, %145 : vector<2x32xf32>
    %151 = arith.addf %149, %150 : vector<2x32xf32>
    %152 = math.tanh %151 : vector<2x32xf32>
    %153 = arith.mulf %148, %152 : vector<2x32xf32>
    %c4_i32 = arith.constant 4 : i32
    %154 = arith.mulf %153, %17 : vector<2x32xf32>
    %cst_36 = arith.constant dense<0.000000e+00> : vector<2xf32>
    %155 = vector.multi_reduction <add>, %154, %cst_36 [1] : vector<2x32xf32> to vector<2xf32>
    %156 = vector.shape_cast %155 : vector<2xf32> to vector<2x1xf32>
    %157 = vector.broadcast %156 : vector<2x1xf32> to vector<2x8xf32>
    %158 = arith.addf %157, %12 : vector<2x8xf32>
    %159 = arith.negf %158 : vector<2x8xf32>
    %160 = math.exp %159 : vector<2x8xf32>
    %cst_37 = arith.constant 1.000000e+00 : f32
    %161 = vector.broadcast %cst_37 : f32 to vector<2x8xf32>
    %162 = arith.addf %161, %160 : vector<2x8xf32>
    %163 = arith.divf %161, %162 : vector<2x8xf32>
    %164 = vector.shape_cast %163 : vector<2x8xf32> to vector<2x8x1xf32>
    %165 = vector.broadcast %164 : vector<2x8x1xf32> to vector<2x8x32xf32>
    %166 = arith.mulf %165, %15 : vector<2x8x32xf32>
    %cst_38 = arith.constant dense<0.000000e+00> : vector<2x32xf32>
    %167 = vector.multi_reduction <add>, %166, %cst_38 [1] : vector<2x8x32xf32> to vector<2x32xf32>
    %168 = tpu.concatenate %167, %153 in 1 : vector<2x32xf32>, vector<2x32xf32> -> vector<2x64xf32>
    %cst_39 = arith.constant dense<0.000000e+00> : vector<2x128xf32>
    %169 = tpu.matmul %168, %5, %cst_39 {dimension_numbers = #tpu.dot_dimension_numbers<[1], [0], [0], [1], [0, 0, 1, 1], [], []>} : vector<2x64xf32>, vector<64x128xf32>, vector<2x128xf32> -> vector<2x128xf32>
    %170 = arith.addf %169, %19 : vector<2x128xf32>
    %171 = vector.extract_strided_slice %170 {offsets = [0, 0], sizes = [2, 96], strides = [1, 1]} : vector<2x128xf32> to vector<2x96xf32>
    %172 = arith.negf %171 : vector<2x96xf32>
    %173 = math.exp %172 : vector<2x96xf32>
    %cst_40 = arith.constant 1.000000e+00 : f32
    %174 = vector.broadcast %cst_40 : f32 to vector<2x96xf32>
    %175 = arith.addf %174, %173 : vector<2x96xf32>
    %176 = arith.divf %174, %175 : vector<2x96xf32>
    %177 = vector.extract_strided_slice %170 {offsets = [0, 96], sizes = [2, 32], strides = [1, 1]} : vector<2x128xf32> to vector<2x32xf32>
    %178 = math.tanh %177 : vector<2x32xf32>
    %179 = vector.extract_strided_slice %176 {offsets = [0, 0], sizes = [2, 32], strides = [1, 1]} : vector<2x96xf32> to vector<2x32xf32>
    %180 = vector.extract_strided_slice %176 {offsets = [0, 32], sizes = [2, 32], strides = [1, 1]} : vector<2x96xf32> to vector<2x32xf32>
    %181 = vector.extract_strided_slice %176 {offsets = [0, 64], sizes = [2, 32], strides = [1, 1]} : vector<2x96xf32> to vector<2x32xf32>
    %182 = arith.mulf %180, %151 : vector<2x32xf32>
    %183 = arith.mulf %179, %178 : vector<2x32xf32>
    %184 = arith.addf %182, %183 : vector<2x32xf32>
    %185 = math.tanh %184 : vector<2x32xf32>
    %186 = arith.mulf %181, %185 : vector<2x32xf32>
    %c5_i32 = arith.constant 5 : i32
    %187 = arith.mulf %186, %17 : vector<2x32xf32>
    %cst_41 = arith.constant dense<0.000000e+00> : vector<2xf32>
    %188 = vector.multi_reduction <add>, %187, %cst_41 [1] : vector<2x32xf32> to vector<2xf32>
    %189 = vector.shape_cast %188 : vector<2xf32> to vector<2x1xf32>
    %190 = vector.broadcast %189 : vector<2x1xf32> to vector<2x8xf32>
    %191 = arith.addf %190, %12 : vector<2x8xf32>
    %192 = arith.negf %191 : vector<2x8xf32>
    %193 = math.exp %192 : vector<2x8xf32>
    %cst_42 = arith.constant 1.000000e+00 : f32
    %194 = vector.broadcast %cst_42 : f32 to vector<2x8xf32>
    %195 = arith.addf %194, %193 : vector<2x8xf32>
    %196 = arith.divf %194, %195 : vector<2x8xf32>
    %197 = vector.shape_cast %196 : vector<2x8xf32> to vector<2x8x1xf32>
    %198 = vector.broadcast %197 : vector<2x8x1xf32> to vector<2x8x32xf32>
    %199 = arith.mulf %198, %15 : vector<2x8x32xf32>
    %cst_43 = arith.constant dense<0.000000e+00> : vector<2x32xf32>
    %200 = vector.multi_reduction <add>, %199, %cst_43 [1] : vector<2x8x32xf32> to vector<2x32xf32>
    %201 = tpu.concatenate %200, %186 in 1 : vector<2x32xf32>, vector<2x32xf32> -> vector<2x64xf32>
    %cst_44 = arith.constant dense<0.000000e+00> : vector<2x128xf32>
    %202 = tpu.matmul %201, %5, %cst_44 {dimension_numbers = #tpu.dot_dimension_numbers<[1], [0], [0], [1], [0, 0, 1, 1], [], []>} : vector<2x64xf32>, vector<64x128xf32>, vector<2x128xf32> -> vector<2x128xf32>
    %203 = arith.addf %202, %19 : vector<2x128xf32>
    %204 = vector.extract_strided_slice %203 {offsets = [0, 0], sizes = [2, 96], strides = [1, 1]} : vector<2x128xf32> to vector<2x96xf32>
    %205 = arith.negf %204 : vector<2x96xf32>
    %206 = math.exp %205 : vector<2x96xf32>
    %cst_45 = arith.constant 1.000000e+00 : f32
    %207 = vector.broadcast %cst_45 : f32 to vector<2x96xf32>
    %208 = arith.addf %207, %206 : vector<2x96xf32>
    %209 = arith.divf %207, %208 : vector<2x96xf32>
    %210 = vector.extract_strided_slice %203 {offsets = [0, 96], sizes = [2, 32], strides = [1, 1]} : vector<2x128xf32> to vector<2x32xf32>
    %211 = math.tanh %210 : vector<2x32xf32>
    %212 = vector.extract_strided_slice %209 {offsets = [0, 0], sizes = [2, 32], strides = [1, 1]} : vector<2x96xf32> to vector<2x32xf32>
    %213 = vector.extract_strided_slice %209 {offsets = [0, 32], sizes = [2, 32], strides = [1, 1]} : vector<2x96xf32> to vector<2x32xf32>
    %214 = vector.extract_strided_slice %209 {offsets = [0, 64], sizes = [2, 32], strides = [1, 1]} : vector<2x96xf32> to vector<2x32xf32>
    %215 = arith.mulf %213, %184 : vector<2x32xf32>
    %216 = arith.mulf %212, %211 : vector<2x32xf32>
    %217 = arith.addf %215, %216 : vector<2x32xf32>
    %218 = math.tanh %217 : vector<2x32xf32>
    %219 = arith.mulf %214, %218 : vector<2x32xf32>
    %c0_46 = arith.constant 0 : index
    %c0_47 = arith.constant 0 : index
    %220 = vector.load %arg8[%c0_46, %c0_47] : memref<2x32xf32, #tpu.memory_space<vmem>>, vector<2x32xf32>
    tpu.vector_store %arg8[%c0_46, %c0_47], %219 {strides = array<i32>} : memref<2x32xf32, #tpu.memory_space<vmem>>, vector<2x32xf32>,
    %c0_48 = arith.constant 0 : index
    %c0_49 = arith.constant 0 : index
    %221 = vector.load %arg9[%c0_48, %c0_49] : memref<2x32xf32, #tpu.memory_space<vmem>>, vector<2x32xf32>
    tpu.vector_store %arg9[%c0_48, %c0_49], %217 {strides = array<i32>} : memref<2x32xf32, #tpu.memory_space<vmem>>, vector<2x32xf32>,
    return
  }
  func.func @transform_0(%arg0: i32) -> (i32, i32, i32) {
    %c0_i32 = arith.constant 0 : i32
    %c0_i32_0 = arith.constant 0 : i32
    %c0_i32_1 = arith.constant 0 : i32
    return %arg0, %c0_i32, %c0_i32_0 : i32, i32, i32
  }
  func.func @transform_1(%arg0: i32) -> (i32, i32) {
    %c0_i32 = arith.constant 0 : i32
    %c0_i32_0 = arith.constant 0 : i32
    return %arg0, %c0_i32 : i32, i32
  }
  func.func @transform_2(%arg0: i32) -> (i32, i32) {
    %c0_i32 = arith.constant 0 : i32
    %c0_i32_0 = arith.constant 0 : i32
    %c0_i32_1 = arith.constant 0 : i32
    return %c0_i32, %c0_i32_0 : i32, i32
  }
  func.func @transform_3(%arg0: i32) -> (i32, i32) {
    %c0_i32 = arith.constant 0 : i32
    %c0_i32_0 = arith.constant 0 : i32
    %c0_i32_1 = arith.constant 0 : i32
    return %c0_i32, %c0_i32_0 : i32, i32
  }
  func.func @transform_4(%arg0: i32) -> (i32, i32) {
    %c0_i32 = arith.constant 0 : i32
    %c0_i32_0 = arith.constant 0 : i32
    %c0_i32_1 = arith.constant 0 : i32
    return %c0_i32, %c0_i32_0 : i32, i32
  }
  func.func @transform_5(%arg0: i32) -> (i32, i32) {
    %c0_i32 = arith.constant 0 : i32
    %c0_i32_0 = arith.constant 0 : i32
    %c0_i32_1 = arith.constant 0 : i32
    return %c0_i32, %c0_i32_0 : i32, i32
  }
  func.func @transform_6(%arg0: i32) -> (i32, i32) {
    %c0_i32 = arith.constant 0 : i32
    %c0_i32_0 = arith.constant 0 : i32
    %c0_i32_1 = arith.constant 0 : i32
    return %c0_i32, %c0_i32_0 : i32, i32
  }
  func.func @transform_7(%arg0: i32) -> (i32, i32) {
    %c0_i32 = arith.constant 0 : i32
    %c0_i32_0 = arith.constant 0 : i32
    return %arg0, %c0_i32 : i32, i32
  }
  func.func @transform_8(%arg0: i32) -> (i32, i32) {
    %c0_i32 = arith.constant 0 : i32
    %c0_i32_0 = arith.constant 0 : i32
    return %arg0, %c0_i32 : i32, i32
  }
}

</mosaic_0001>

<llo_original>
// kernel: tpu_custom_call.1
$region0: #{tpu_custom_call.1}
  #allocation0 [shape = 'u32[]', space=smem, size = 0x4, offset = 0x4, fixed_abs, tag = 'smem constant byte address 0x4 - core index']
  #allocation1 [shape = 'u32[144,128]{1,0:T(1,128)}', space=vmem, size = 0x12000, scoped, tag = 'internal scratch']
  #allocation2 [shape = 'f32[1,1]{1,0:T(1,128)S(1)}', space=vmem, size = 0x200, scoped, tag = 'scoped memory for tpu_custom_call.1']
  %s0 = inlined_call_operand.hbm [shape: f32[2,8,32], index: 0, kind: input, shape index: {}]
  %s1 = inlined_call_operand.vmem [shape: f32[2,8], index: 1, kind: input, shape index: {}]
  %s2 = inlined_call_operand.vmem [shape: f32[1,32], index: 2, kind: input, shape index: {}]
  %s3 = inlined_call_operand.vmem [shape: f32[1,32], index: 3, kind: input, shape index: {}]
  %s4 = inlined_call_operand.<no memory space> [shape: f32[1,1], index: 4, kind: input, shape index: {}]
  %s5 = inlined_call_operand.hbm [shape: f32[64,128], index: 5, kind: input, shape index: {}]
  %s6 = inlined_call_operand.vmem [shape: f32[1,128], index: 6, kind: input, shape index: {}]
  %s7 = inlined_call_operand.hbm [shape: f32[2,32], index: 7, kind: output, shape index: {0}]
  %s8 = inlined_call_operand.hbm [shape: f32[2,32], index: 8, kind: output, shape index: {1}]
  %9 = xla_tuple %s7, %s8
  %s10 = sld [smem:[#allocation0]]
  $region54: #{tpu_custom_call.1} parent=0
    _
  %s12 = ssub.s32 1, %s10
  %s13 = scalar_select 0, %s12, %s10
  %v14 = vstv %s4
  %15 = vst [vmem:[#allocation2] sm:$0x1] %v14
  $region1: #{tpu_custom_call.1} parent=0
    #allocation3 [shape = 'u8[8192]{0}', space=vmem, size = 0x2000, scoped, tag = 'input window, operand 0, single buffered']
    #allocation4 [shape = 's32[1]{0}', space=sflag, size = 0x4, scoped, tag = 'scoped memory for tpu_custom_call.1']
    #allocation5 [shape = 's32[1]{0}', space=sflag, size = 0x4, scoped, tag = 'scoped memory for tpu_custom_call.1']
    #allocation6 [shape = 'u8[32768]{0}', space=vmem, size = 0x8000, scoped, tag = 'input window, operand 5, single buffered']
    #allocation7 [shape = 's32[1]{0}', space=sflag, size = 0x4, scoped, tag = 'scoped memory for tpu_custom_call.1']
    #allocation8 [shape = 'u8[1024]{0}', space=vmem, size = 0x400, scoped, tag = 'output window, operand 0, single buffered']
    #allocation9 [shape = 'u8[1024]{0}', space=vmem, size = 0x400, scoped, tag = 'output window, operand 1, single buffered']
    #allocation10 [shape = 's32[1]{0}', space=sflag, size = 0x4, scoped, tag = 'scoped memory for tpu_custom_call.1']
    %16 = vsyncpa [#allocation4], 0
    %17 = vsyncpa [#allocation7], 0
    %18 = vsyncpa [#allocation5], 0
    %19 = vsyncpa [#allocation10], 0
    // Predicated region
    $region2: #{tpu_custom_call.1} parent=1 // pred_check
      _
    $region3: #{tpu_custom_call.1} parent=1 // pred_check_branch
      %21 = sbr.rel (0) target = $region5
    $region4: #{tpu_custom_call.1} parent=1 // pred_region
      %s23 = ssub.s32 256, 256
      %24 = vsyncadd [#allocation4], %s23
      %s25 = sshll.u32 [#allocation3], 4
      %s26 = int_to_ptr.vmem [resolvable:$true] %s25
      %31 = dma.hbm_to_vmem [thread:$0]  %s0, 256, %s26, [#allocation4], 128, 128, 8
    $region5: #{tpu_custom_call.1} parent=1 // pred_fallthru
      _
    // Predicated region
    $region6: #{tpu_custom_call.1} parent=1 // pred_check
      _
    $region7: #{tpu_custom_call.1} parent=1 // pred_check_branch
      %33 = sbr.rel (0) target = $region9
    $region8: #{tpu_custom_call.1} parent=1 // pred_region
      _
    $region9: #{tpu_custom_call.1} parent=1 // pred_fallthru
      _
    // Predicated region
    $region10: #{tpu_custom_call.1} parent=1 // pred_check
      _
    $region11: #{tpu_custom_call.1} parent=1 // pred_check_branch
      %35 = sbr.rel (0) target = $region13
    $region12: #{tpu_custom_call.1} parent=1 // pred_region
      _
    $region13: #{tpu_custom_call.1} parent=1 // pred_fallthru
      _
    // Predicated region
    $region14: #{tpu_custom_call.1} parent=1 // pred_check
      _
    $region15: #{tpu_custom_call.1} parent=1 // pred_check_branch
      %37 = sbr.rel (0) target = $region17
    $region16: #{tpu_custom_call.1} parent=1 // pred_region
      _
    $region17: #{tpu_custom_call.1} parent=1 // pred_fallthru
      _
    // Predicated region
    $region18: #{tpu_custom_call.1} parent=1 // pred_check
      _
    $region19: #{tpu_custom_call.1} parent=1 // pred_check_branch
      %39 = sbr.rel (0) target = $region21
    $region20: #{tpu_custom_call.1} parent=1 // pred_region
      _
    $region21: #{tpu_custom_call.1} parent=1 // pred_fallthru
      _
    // Predicated region
    $region22: #{tpu_custom_call.1} parent=1 // pred_check
      _
    $region23: #{tpu_custom_call.1} parent=1 // pred_check_branch
      %41 = sbr.rel (0) target = $region25
    $region24: #{tpu_custom_call.1} parent=1 // pred_region
      %s43 = ssub.s32 1024, 1024
      %44 = vsyncadd [#allocation7], %s43
      %s45 = sshll.u32 [#allocation6], 4
      %s46 = int_to_ptr.vmem [resolvable:$true] %s45
      %51 = dma.hbm_to_vmem [thread:$0]  %s5, 1024, %s46, [#allocation7], 128, 128, 8
    $region25: #{tpu_custom_call.1} parent=1 // pred_fallthru
      _
    // Predicated region
    $region26: #{tpu_custom_call.1} parent=1 // pred_check
      _
    $region27: #{tpu_custom_call.1} parent=1 // pred_check_branch
      %53 = sbr.rel (0) target = $region29
    $region28: #{tpu_custom_call.1} parent=1 // pred_region
      _
    $region29: #{tpu_custom_call.1} parent=1 // pred_fallthru
      _
    // Predicated region
    $region30: #{tpu_custom_call.1} parent=1 // pred_check
      _
    $region31: #{tpu_custom_call.1} parent=1 // pred_check_branch
      %55 = sbr.rel (0) target = $region33
    $region32: #{tpu_custom_call.1} parent=1 // pred_region
      %56 = dma.done [#allocation4], 256
    $region33: #{tpu_custom_call.1} parent=1 // pred_fallthru
      _
    // Predicated region
    $region34: #{tpu_custom_call.1} parent=1 // pred_check
      _
    $region35: #{tpu_custom_call.1} parent=1 // pred_check_branch
      %58 = sbr.rel (0) target = $region37
    $region36: #{tpu_custom_call.1} parent=1 // pred_region
      %59 = dma.done [#allocation7], 1024
    $region37: #{tpu_custom_call.1} parent=1 // pred_fallthru
      _
    %v60 = vld [vmem:[#allocation3] sm:$0xff]
    %v61 = vld [vmem:[#allocation3 + $0x8] sm:$0xff]
    %v62 = vld [vmem:[%s1] sm:$0x3]
    %v63 = vld [vmem:[%s2] sm:$0x1]
    %v64 = vld [vmem:[%s3] sm:$0x1]
    %v65 = vld [vmem:[#allocation2] sm:$0x1]
    %v66 = vld [vmem:[#allocation6] sm:$0xff]
    %v67 = vld [vmem:[#allocation6 + $0x8] sm:$0xff]
    %v68 = vld [vmem:[#allocation6 + $0x10] sm:$0xff]
    %v69 = vld [vmem:[#allocation6 + $0x18] sm:$0xff]
    %v70 = vld [vmem:[#allocation6 + $0x20] sm:$0xff]
    %v71 = vld [vmem:[#allocation6 + $0x28] sm:$0xff]
    %v72 = vld [vmem:[#allocation6 + $0x30] sm:$0xff]
    %v73 = vld [vmem:[#allocation6 + $0x38] sm:$0xff]
    %v74 = vld [vmem:[%s6] sm:$0x1]
    %v76 = vlaneseq
    %v77 = vshrl.u32 %v76, 7
    %v78 = vsub.s32 0, %v77
    %v79 = vrot.slane %v64, %v78
    %v81 = vmul.f32 %v60, %v79
    %v82 = vmul.f32 %v61, %v79
    %vm83 = vcmask 261120
    %v84 = vsel %vm83, %v81, 0.0
    %85 = vadd.xlane.f32.xlu0 %v84
    %v86 = vpop.xlane.xlu0 %85
    %v87 = vsel %vm83, %v82, 0.0
    %88 = vadd.xlane.f32.xlu0 %v87
    %v89 = vpop.xlane.xlu0 %88
    %v91 = vlaneseq
    %v92 = vshrl.u32 %v91, 7
    %v93 = vsub.s32 0, %v92
    %v94 = vrot.slane %v65, %v93
    %95 = vset.pattern.permute.xlu0 0
    %96 = vperm.xlu0 %95, %v94
    %v97 = vpop.permute.xlu0 %96
    %v99 = vadd.f32 %v86, %v97
    %v100 = vadd.f32 %v89, %v97
    %v101 = vlaneseq
    %v102 = vshrl.u32 %v101, 7
    %v103 = vsub.s32 0, %v102
    %v104 = vrot.slane %v62, %v103
    %106 = vbcast.lane.b32.xlu0 %v104, 256
    %v107 = vpop.permute.xlu0 %106
    %v108 = vlaneseq
    %v109 = vshrl.u32 %v108, 7
    %v110 = vsub.s32 1, %v109
    %v111 = vrot.slane %v62, %v110
    %113 = vbcast.lane.b32.xlu0 %v111, 256
    %v114 = vpop.permute.xlu0 %113
    %v115 = vmul.f32 %v107, %v60
    %v116 = vmul.f32 %v114, %v61
    %v118 = vlaneseq
    %v119 = vshrl.u32 %v118, 7
    %v120 = vsub.s32 0, %v119
    %v121 = vrot.slane %v63, %v120
    %v124 = vlaneseq
    %v125 = vshrl.u32 %v124, 7
    %v126 = vsub.s32 0, %v125
    %v127 = vrot.slane %v74, %v126
    %v129 = vmul.f32 %v121, 0.0
    %v130 = vsel %vm83, %v129, 0.0
    %131 = vadd.xlane.f32.xlu0 %v130
    %v132 = vpop.xlane.xlu0 %131
    %v133 = vadd.f32 %v132, %v99
    %v134 = vadd.f32 %v132, %v100
    %v135 = vxor.u32 %v133, 2147483648
    %v136 = vxor.u32 %v134, 2147483648
    %v137 = vmul.f32 %v135, 1.442695
    %v138 = vpow.pop %v137
    %v139 = vmul.f32 %v136, 1.442695
    %v140 = vpow.pop %v139
    %v141 = vadd.f32 %v138, 1.0
    %v142 = vadd.f32 %v140, 1.0
    %v143 = vrcp.pop %v141
    %v144 = vmul.f32 1.0, %v143
    %v145 = vrcp.pop %v142
    %v146 = vmul.f32 1.0, %v145
    %v147 = vmul.f32 %v144, %v115
    %v148 = vmul.f32 %v146, %v116
    %v149 = vsel %vm83, %v147, 0.0
    %v150 = vrot.slane %v149, 4
    %v151 = vadd.f32 %v149, %v150
    %v152 = vrot.slane %v151, 2
    %v153 = vadd.f32 %v151, %v152
    %v154 = vrot.slane %v153, 1
    %v155 = vadd.f32 %v153, %v154
    %v156 = vsel %vm83, %v148, 0.0
    %v157 = vrot.slane %v156, 4
    %v158 = vadd.f32 %v156, %v157
    %v159 = vrot.slane %v158, 2
    %v160 = vadd.f32 %v158, %v159
    %v161 = vrot.slane %v160, 1
    %v162 = vadd.f32 %v160, %v161
    %vm165 = vcmask 1041409
    %v166 = vsel %vm165, %v162, %v155
    %v168 = vsel %vm83, %v166, 0.0
    %vm169 = vcmask 523264
    %v171 = vsel %vm169, %v168, 0
    %173 = vmatprep.subr.mxu0 0.0
    %174 = vmatpush1.msra.mxu0 %v66
    %175 = vmatprep.subr.mxu0 0.0
    %176 = vmatpush1.msra.mxu0 %v67
    %177 = vmatprep.subr.mxu0 0.0
    %178 = vmatpush1.msra.mxu0 %v68
    %179 = vmatprep.subr.mxu0 0.0
    %180 = vmatpush1.msra.mxu0 %v69
    %181 = vmatprep.subr.mxu0 0.0
    %182 = vmatpush1.msra.mxu0 %v70
    %183 = vmatprep.subr.mxu0 0.0
    %184 = vmatpush1.msra.mxu0 %v71
    %185 = vmatprep.subr.mxu0 0.0
    %186 = vmatpush1.msra.mxu0 %v72
    %187 = vmatprep.subr.mxu0 0.0
    %188 = vmatpush1.msra.mxu0 %v73
    %189 = vmatprep.subr.mxu0 0.0
    %190 = vmatpush1.msra.mxu0 0.0
    %191 = vmatprep.subr.mxu0 0.0
    %192 = vmatpush1.msra.mxu0 0.0
    %193 = vmatprep.subr.mxu0 0.0
    %194 = vmatpush1.msra.mxu0 0.0
    %195 = vmatprep.subr.mxu0 0.0
    %196 = vmatpush1.msra.mxu0 0.0
    %197 = vmatprep.subr.mxu0 0.0
    %198 = vmatpush1.msra.mxu0 0.0
    %199 = vmatprep.subr.mxu0 0.0
    %200 = vmatpush1.msra.mxu0 0.0
    %201 = vmatprep.subr.mxu0 0.0
    %202 = vmatpush1.msra.mxu0 0.0
    %203 = vmatprep.subr.mxu0 0.0
    %204 = vmatpush1.msra.mxu0 0.0
    %205 = vmatprep.subr.mxu0 0.0
    %206 = vmatpush1.msra.mxu0 0.0
    %207 = vmatprep.subr.mxu0 0.0
    %208 = vmatpush1.msra.mxu0 0.0
    %209 = vmatprep.subr.mxu0 0.0
    %210 = vmatpush1.msra.mxu0 0.0
    %211 = vmatprep.subr.mxu0 0.0
    %212 = vmatpush1.msra.mxu0 0.0
    %213 = vmatprep.subr.mxu0 0.0
    %214 = vmatpush1.msra.mxu0 0.0
    %215 = vmatprep.subr.mxu0 0.0
    %216 = vmatpush1.msra.mxu0 0.0
    %217 = vmatprep.subr.mxu0 0.0
    %218 = vmatpush1.msra.mxu0 0.0
    %219 = vmatprep.subr.mxu0 0.0
    %220 = vmatpush1.msra.mxu0 0.0
    %221 = vmatprep.subr.mxu0 0.0
    %222 = vmatpush1.msra.mxu0 0.0
    %223 = vmatprep.subr.mxu0 0.0
    %224 = vmatpush1.msra.mxu0 0.0
    %225 = vmatprep.subr.mxu0 0.0
    %226 = vmatpush1.msra.mxu0 0.0
    %227 = vmatprep.subr.mxu0 0.0
    %228 = vmatpush1.msra.mxu0 0.0
    %229 = vmatprep.subr.mxu0 0.0
    %230 = vmatpush1.msra.mxu0 0.0
    %231 = vmatprep.subr.mxu0 0.0
    %232 = vmatpush1.msra.mxu0 0.0
    %233 = vmatprep.subr.mxu0 0.0
    %234 = vmatpush1.msra.mxu0 0.0
    %235 = vmatprep.subr.mxu0 0.0
    %236 = vmatpush1.msra.mxu0 0.0
    %237 = vmatprep.mubr.f32.mxu0 0.0
    %238 = vmatmul.mubr.f32.gmra.mrb[0].mxu0 %v171
    %v239 = vpop.f32.mrb[0].mxu0
    %v240 = vadd.f32 %v127, %v239
    %v241 = vpop.f32.mrb[0].mxu0
    %242 = vdwg.mxu0
    %v243 = vxor.u32 %v240, 2147483648
    %v244 = vmul.f32 %v243, 1.442695
    %v245 = vpow.pop %v244
    %v246 = vadd.f32 %v245, 1.0
    %v247 = vrcp.pop %v246
    %v248 = vmul.f32 1.0, %v247
    %v249 = vtanh.pop %v240
    %v250 = vmul.f32 %v248, 0.0
    %252 = vrot.lane.b32.xlu0 %v249, 32
    %v253 = vpop.permute.xlu0 %252
    %v255 = vmul.f32 %v248, %v253
    %257 = vrot.lane.b32.xlu0 %v255, 32
    %v258 = vpop.permute.xlu0 %257
    %v260 = vadd.f32 %v250, %v258
    %v261 = vtanh.pop %v260
    %263 = vrot.lane.b32.xlu0 %v261, 32
    %v264 = vpop.permute.xlu0 %263
    %v266 = vmul.f32 %v248, %v264
    %267 = vrot.lane.b32.xlu0 %v121, 64
    %v268 = vpop.permute.xlu0 %267
    %v270 = vmul.f32 %v266, %v268
    %272 = vrot.lane.b32.xlu0 %v270, 64
    %v273 = vpop.permute.xlu0 %272
    %vm275 = vcmask 254976
    %v276 = vsel %vm275, %v273, 0.0
    %277 = vadd.xlane.f32.xlu0 %v276
    %v278 = vpop.xlane.xlu0 %277
    %v281 = vlaneseq
    %v282 = vand.u32 %v281, 127
    %v283 = vlaneseq
    %v284 = vshrl.u32 %v283, 7
    %v285 = vsub.s32 %v282, %v284
    %v286 = vrot.slane %v99, %v285
    %v287 = vlaneseq
    %v288 = vshrl.u32 %v287, 7
    %v289 = vsub.s32 %v282, %v288
    %v290 = vrot.slane %v100, %v289
    %v291 = vsel %vm165, %v290, %v286
    %v293 = vadd.f32 %v278, %v291
    %v294 = vxor.u32 %v293, 2147483648
    %v295 = vmul.f32 %v294, 1.442695
    %v296 = vpow.pop %v295
    %v297 = vadd.f32 %v296, 1.0
    %v298 = vrcp.pop %v297
    %v299 = vmul.f32 1.0, %v298
    %v300 = vlaneseq
    %v301 = vshrl.u32 %v300, 7
    %v302 = vsub.s32 0, %v301
    %v303 = vrot.slane %v299, %v302
    %305 = vbcast.lane.b32.xlu0 %v303, 256
    %v306 = vpop.permute.xlu0 %305
    %v307 = vlaneseq
    %v308 = vshrl.u32 %v307, 7
    %v309 = vsub.s32 1, %v308
    %v310 = vrot.slane %v299, %v309
    %312 = vbcast.lane.b32.xlu0 %v310, 256
    %v313 = vpop.permute.xlu0 %312
    %v314 = vmul.f32 %v306, %v115
    %v315 = vmul.f32 %v313, %v116
    %v316 = vsel %vm83, %v314, 0.0
    %v317 = vrot.slane %v316, 4
    %v318 = vadd.f32 %v316, %v317
    %v319 = vrot.slane %v318, 2
    %v320 = vadd.f32 %v318, %v319
    %v321 = vrot.slane %v320, 1
    %v322 = vadd.f32 %v320, %v321
    %v323 = vsel %vm83, %v315, 0.0
    %v324 = vrot.slane %v323, 4
    %v325 = vadd.f32 %v323, %v324
    %v326 = vrot.slane %v325, 2
    %v327 = vadd.f32 %v325, %v326
    %v328 = vrot.slane %v327, 1
    %v329 = vadd.f32 %v327, %v328
    %v332 = vsel %vm165, %v329, %v322
    %335 = vrot.lane.b32.xlu0 %v266, 96
    %v336 = vpop.permute.xlu0 %335
    %v338 = vsel %vm83, %v332, %v336
    %v340 = vsel %vm169, %v338, 0
    %342 = vmatprep.subr.mxu0 0.0
    %343 = vmatpush1.msra.mxu0 %v66
    %344 = vmatprep.subr.mxu0 0.0
    %345 = vmatpush1.msra.mxu0 %v67
    %346 = vmatprep.subr.mxu0 0.0
    %347 = vmatpush1.msra.mxu0 %v68
    %348 = vmatprep.subr.mxu0 0.0
    %349 = vmatpush1.msra.mxu0 %v69
    %350 = vmatprep.subr.mxu0 0.0
    %351 = vmatpush1.msra.mxu0 %v70
    %352 = vmatprep.subr.mxu0 0.0
    %353 = vmatpush1.msra.mxu0 %v71
    %354 = vmatprep.subr.mxu0 0.0
    %355 = vmatpush1.msra.mxu0 %v72
    %356 = vmatprep.subr.mxu0 0.0
    %357 = vmatpush1.msra.mxu0 %v73
    %358 = vmatprep.subr.mxu0 0.0
    %359 = vmatpush1.msra.mxu0 0.0
    %360 = vmatprep.subr.mxu0 0.0
    %361 = vmatpush1.msra.mxu0 0.0
    %362 = vmatprep.subr.mxu0 0.0
    %363 = vmatpush1.msra.mxu0 0.0
    %364 = vmatprep.subr.mxu0 0.0
    %365 = vmatpush1.msra.mxu0 0.0
    %366 = vmatprep.subr.mxu0 0.0
    %367 = vmatpush1.msra.mxu0 0.0
    %368 = vmatprep.subr.mxu0 0.0
    %369 = vmatpush1.msra.mxu0 0.0
    %370 = vmatprep.subr.mxu0 0.0
    %371 = vmatpush1.msra.mxu0 0.0
    %372 = vmatprep.subr.mxu0 0.0
    %373 = vmatpush1.msra.mxu0 0.0
    %374 = vmatprep.subr.mxu0 0.0
    %375 = vmatpush1.msra.mxu0 0.0
    %376 = vmatprep.subr.mxu0 0.0
    %377 = vmatpush1.msra.mxu0 0.0
    %378 = vmatprep.subr.mxu0 0.0
    %379 = vmatpush1.msra.mxu0 0.0
    %380 = vmatprep.subr.mxu0 0.0
    %381 = vmatpush1.msra.mxu0 0.0
    %382 = vmatprep.subr.mxu0 0.0
    %383 = vmatpush1.msra.mxu0 0.0
    %384 = vmatprep.subr.mxu0 0.0
    %385 = vmatpush1.msra.mxu0 0.0
    %386 = vmatprep.subr.mxu0 0.0
    %387 = vmatpush1.msra.mxu0 0.0
    %388 = vmatprep.subr.mxu0 0.0
    %389 = vmatpush1.msra.mxu0 0.0
    %390 = vmatprep.subr.mxu0 0.0
    %391 = vmatpush1.msra.mxu0 0.0
    %392 = vmatprep.subr.mxu0 0.0
    %393 = vmatpush1.msra.mxu0 0.0
    %394 = vmatprep.subr.mxu0 0.0
    %395 = vmatpush1.msra.mxu0 0.0
    %396 = vmatprep.subr.mxu0 0.0
    %397 = vmatpush1.msra.mxu0 0.0
    %398 = vmatprep.subr.mxu0 0.0
    %399 = vmatpush1.msra.mxu0 0.0
    %400 = vmatprep.subr.mxu0 0.0
    %401 = vmatpush1.msra.mxu0 0.0
    %402 = vmatprep.subr.mxu0 0.0
    %403 = vmatpush1.msra.mxu0 0.0
    %404 = vmatprep.subr.mxu0 0.0
    %405 = vmatpush1.msra.mxu0 0.0
    %406 = vmatprep.mubr.f32.mxu0 0.0
    %407 = vmatmul.mubr.f32.gmra.mrb[0].mxu0 %v340
    %v408 = vpop.f32.mrb[0].mxu0
    %v409 = vadd.f32 %v127, %v408
    %v410 = vpop.f32.mrb[0].mxu0
    %411 = vdwg.mxu0
    %v412 = vxor.u32 %v409, 2147483648
    %v413 = vmul.f32 %v412, 1.442695
    %v414 = vpow.pop %v413
    %v415 = vadd.f32 %v414, 1.0
    %v416 = vrcp.pop %v415
    %v417 = vmul.f32 1.0, %v416
    %v418 = vtanh.pop %v409
    %v419 = vmul.f32 %v417, %v260
    %421 = vrot.lane.b32.xlu0 %v418, 32
    %v422 = vpop.permute.xlu0 %421
    %v424 = vmul.f32 %v417, %v422
    %426 = vrot.lane.b32.xlu0 %v424, 32
    %v427 = vpop.permute.xlu0 %426
    %v429 = vadd.f32 %v419, %v427
    %v430 = vtanh.pop %v429
    %432 = vrot.lane.b32.xlu0 %v430, 32
    %v433 = vpop.permute.xlu0 %432
    %v435 = vmul.f32 %v417, %v433
    %v436 = vmul.f32 %v435, %v268
    %438 = vrot.lane.b32.xlu0 %v436, 64
    %v439 = vpop.permute.xlu0 %438
    %v441 = vsel %vm275, %v439, 0.0
    %442 = vadd.xlane.f32.xlu0 %v441
    %v443 = vpop.xlane.xlu0 %442
    %v444 = vadd.f32 %v443, %v291
    %v445 = vxor.u32 %v444, 2147483648
    %v446 = vmul.f32 %v445, 1.442695
    %v447 = vpow.pop %v446
    %v448 = vadd.f32 %v447, 1.0
    %v449 = vrcp.pop %v448
    %v450 = vmul.f32 1.0, %v449
    %v451 = vlaneseq
    %v452 = vshrl.u32 %v451, 7
    %v453 = vsub.s32 0, %v452
    %v454 = vrot.slane %v450, %v453
    %456 = vbcast.lane.b32.xlu0 %v454, 256
    %v457 = vpop.permute.xlu0 %456
    %v458 = vlaneseq
    %v459 = vshrl.u32 %v458, 7
    %v460 = vsub.s32 1, %v459
    %v461 = vrot.slane %v450, %v460
    %463 = vbcast.lane.b32.xlu0 %v461, 256
    %v464 = vpop.permute.xlu0 %463
    %v465 = vmul.f32 %v457, %v115
    %v466 = vmul.f32 %v464, %v116
    %v467 = vsel %vm83, %v465, 0.0
    %v468 = vrot.slane %v467, 4
    %v469 = vadd.f32 %v467, %v468
    %v470 = vrot.slane %v469, 2
    %v471 = vadd.f32 %v469, %v470
    %v472 = vrot.slane %v471, 1
    %v473 = vadd.f32 %v471, %v472
    %v474 = vsel %vm83, %v466, 0.0
    %v475 = vrot.slane %v474, 4
    %v476 = vadd.f32 %v474, %v475
    %v477 = vrot.slane %v476, 2
    %v478 = vadd.f32 %v476, %v477
    %v479 = vrot.slane %v478, 1
    %v480 = vadd.f32 %v478, %v479
    %v483 = vsel %vm165, %v480, %v473
    %486 = vrot.lane.b32.xlu0 %v435, 96
    %v487 = vpop.permute.xlu0 %486
    %v489 = vsel %vm83, %v483, %v487
    %v491 = vsel %vm169, %v489, 0
    %493 = vmatprep.subr.mxu0 0.0
    %494 = vmatpush1.msra.mxu0 %v66
    %495 = vmatprep.subr.mxu0 0.0
    %496 = vmatpush1.msra.mxu0 %v67
    %497 = vmatprep.subr.mxu0 0.0
    %498 = vmatpush1.msra.mxu0 %v68
    %499 = vmatprep.subr.mxu0 0.0
    %500 = vmatpush1.msra.mxu0 %v69
    %501 = vmatprep.subr.mxu0 0.0
    %502 = vmatpush1.msra.mxu0 %v70
    %503 = vmatprep.subr.mxu0 0.0
    %504 = vmatpush1.msra.mxu0 %v71
    %505 = vmatprep.subr.mxu0 0.0
    %506 = vmatpush1.msra.mxu0 %v72
    %507 = vmatprep.subr.mxu0 0.0
    %508 = vmatpush1.msra.mxu0 %v73
    %509 = vmatprep.subr.mxu0 0.0
    %510 = vmatpush1.msra.mxu0 0.0
    %511 = vmatprep.subr.mxu0 0.0
    %512 = vmatpush1.msra.mxu0 0.0
    %513 = vmatprep.subr.mxu0 0.0
    %514 = vmatpush1.msra.mxu0 0.0
    %515 = vmatprep.subr.mxu0 0.0
    %516 = vmatpush1.msra.mxu0 0.0
    %517 = vmatprep.subr.mxu0 0.0
    %518 = vmatpush1.msra.mxu0 0.0
    %519 = vmatprep.subr.mxu0 0.0
    %520 = vmatpush1.msra.mxu0 0.0
    %521 = vmatprep.subr.mxu0 0.0
    %522 = vmatpush1.msra.mxu0 0.0
    %523 = vmatprep.subr.mxu0 0.0
    %524 = vmatpush1.msra.mxu0 0.0
    %525 = vmatprep.subr.mxu0 0.0
    %526 = vmatpush1.msra.mxu0 0.0
    %527 = vmatprep.subr.mxu0 0.0
    %528 = vmatpush1.msra.mxu0 0.0
    %529 = vmatprep.subr.mxu0 0.0
    %530 = vmatpush1.msra.mxu0 0.0
    %531 = vmatprep.subr.mxu0 0.0
    %532 = vmatpush1.msra.mxu0 0.0
    %533 = vmatprep.subr.mxu0 0.0
    %534 = vmatpush1.msra.mxu0 0.0
    %535 = vmatprep.subr.mxu0 0.0
    %536 = vmatpush1.msra.mxu0 0.0
    %537 = vmatprep.subr.mxu0 0.0
    %538 = vmatpush1.msra.mxu0 0.0
    %539 = vmatprep.subr.mxu0 0.0
    %540 = vmatpush1.msra.mxu0 0.0
    %541 = vmatprep.subr.mxu0 0.0
    %542 = vmatpush1.msra.mxu0 0.0
    %543 = vmatprep.subr.mxu0 0.0
    %544 = vmatpush1.msra.mxu0 0.0
    %545 = vmatprep.subr.mxu0 0.0
    %546 = vmatpush1.msra.mxu0 0.0
    %547 = vmatprep.subr.mxu0 0.0
    %548 = vmatpush1.msra.mxu0 0.0
    %549 = vmatprep.subr.mxu0 0.0
    %550 = vmatpush1.msra.mxu0 0.0
    %551 = vmatprep.subr.mxu0 0.0
    %552 = vmatpush1.msra.mxu0 0.0
    %553 = vmatprep.subr.mxu0 0.0
    %554 = vmatpush1.msra.mxu0 0.0
    %555 = vmatprep.subr.mxu0 0.0
    %556 = vmatpush1.msra.mxu0 0.0
    %557 = vmatprep.mubr.f32.mxu0 0.0
    %558 = vmatmul.mubr.f32.gmra.mrb[0].mxu0 %v491
    %v559 = vpop.f32.mrb[0].mxu0
    %v560 = vadd.f32 %v127, %v559
    %v561 = vpop.f32.mrb[0].mxu0
    %562 = vdwg.mxu0
    %v563 = vxor.u32 %v560, 2147483648
    %v564 = vmul.f32 %v563, 1.442695
    %v565 = vpow.pop %v564
    %v566 = vadd.f32 %v565, 1.0
    %v567 = vrcp.pop %v566
    %v568 = vmul.f32 1.0, %v567
    %v569 = vtanh.pop %v560
    %v570 = vmul.f32 %v568, %v429
    %572 = vrot.lane.b32.xlu0 %v569, 32
    %v573 = vpop.permute.xlu0 %572
    %v575 = vmul.f32 %v568, %v573
    %577 = vrot.lane.b32.xlu0 %v575, 32
    %v578 = vpop.permute.xlu0 %577
    %v580 = vadd.f32 %v570, %v578
    %v581 = vtanh.pop %v580
    %583 = vrot.lane.b32.xlu0 %v581, 32
    %v584 = vpop.permute.xlu0 %583
    %v586 = vmul.f32 %v568, %v584
    %v587 = vmul.f32 %v586, %v268
    %589 = vrot.lane.b32.xlu0 %v587, 64
    %v590 = vpop.permute.xlu0 %589
    %v592 = vsel %vm275, %v590, 0.0
    %593 = vadd.xlane.f32.xlu0 %v592
    %v594 = vpop.xlane.xlu0 %593
    %v595 = vadd.f32 %v594, %v291
    %v596 = vxor.u32 %v595, 2147483648
    %v597 = vmul.f32 %v596, 1.442695
    %v598 = vpow.pop %v597
    %v599 = vadd.f32 %v598, 1.0
    %v600 = vrcp.pop %v599
    %v601 = vmul.f32 1.0, %v600
    %v602 = vlaneseq
    %v603 = vshrl.u32 %v602, 7
    %v604 = vsub.s32 0, %v603
    %v605 = vrot.slane %v601, %v604
    %607 = vbcast.lane.b32.xlu0 %v605, 256
    %v608 = vpop.permute.xlu0 %607
    %v609 = vlaneseq
    %v610 = vshrl.u32 %v609, 7
    %v611 = vsub.s32 1, %v610
    %v612 = vrot.slane %v601, %v611
    %614 = vbcast.lane.b32.xlu0 %v612, 256
    %v615 = vpop.permute.xlu0 %614
    %v616 = vmul.f32 %v608, %v115
    %v617 = vmul.f32 %v615, %v116
    %v618 = vsel %vm83, %v616, 0.0
    %v619 = vrot.slane %v618, 4
    %v620 = vadd.f32 %v618, %v619
    %v621 = vrot.slane %v620, 2
    %v622 = vadd.f32 %v620, %v621
    %v623 = vrot.slane %v622, 1
    %v624 = vadd.f32 %v622, %v623
    %v625 = vsel %vm83, %v617, 0.0
    %v626 = vrot.slane %v625, 4
    %v627 = vadd.f32 %v625, %v626
    %v628 = vrot.slane %v627, 2
    %v629 = vadd.f32 %v627, %v628
    %v630 = vrot.slane %v629, 1
    %v631 = vadd.f32 %v629, %v630
    %v634 = vsel %vm165, %v631, %v624
    %637 = vrot.lane.b32.xlu0 %v586, 96
    %v638 = vpop.permute.xlu0 %637
    %v640 = vsel %vm83, %v634, %v638
    %v642 = vsel %vm169, %v640, 0
    %644 = vmatprep.subr.mxu0 0.0
    %645 = vmatpush1.msra.mxu0 %v66
    %646 = vmatprep.subr.mxu0 0.0
    %647 = vmatpush1.msra.mxu0 %v67
    %648 = vmatprep.subr.mxu0 0.0
    %649 = vmatpush1.msra.mxu0 %v68
    %650 = vmatprep.subr.mxu0 0.0
    %651 = vmatpush1.msra.mxu0 %v69
    %652 = vmatprep.subr.mxu0 0.0
    %653 = vmatpush1.msra.mxu0 %v70
    %654 = vmatprep.subr.mxu0 0.0
    %655 = vmatpush1.msra.mxu0 %v71
    %656 = vmatprep.subr.mxu0 0.0
    %657 = vmatpush1.msra.mxu0 %v72
    %658 = vmatprep.subr.mxu0 0.0
    %659 = vmatpush1.msra.mxu0 %v73
    %660 = vmatprep.subr.mxu0 0.0
    %661 = vmatpush1.msra.mxu0 0.0
    %662 = vmatprep.subr.mxu0 0.0
    %663 = vmatpush1.msra.mxu0 0.0
    %664 = vmatprep.subr.mxu0 0.0
    %665 = vmatpush1.msra.mxu0 0.0
    %666 = vmatprep.subr.mxu0 0.0
    %667 = vmatpush1.msra.mxu0 0.0
    %668 = vmatprep.subr.mxu0 0.0
    %669 = vmatpush1.msra.mxu0 0.0
    %670 = vmatprep.subr.mxu0 0.0
    %671 = vmatpush1.msra.mxu0 0.0
    %672 = vmatprep.subr.mxu0 0.0
    %673 = vmatpush1.msra.mxu0 0.0
    %674 = vmatprep.subr.mxu0 0.0
    %675 = vmatpush1.msra.mxu0 0.0
    %676 = vmatprep.subr.mxu0 0.0
    %677 = vmatpush1.msra.mxu0 0.0
    %678 = vmatprep.subr.mxu0 0.0
    %679 = vmatpush1.msra.mxu0 0.0
    %680 = vmatprep.subr.mxu0 0.0
    %681 = vmatpush1.msra.mxu0 0.0
    %682 = vmatprep.subr.mxu0 0.0
    %683 = vmatpush1.msra.mxu0 0.0
    %684 = vmatprep.subr.mxu0 0.0
    %685 = vmatpush1.msra.mxu0 0.0
    %686 = vmatprep.subr.mxu0 0.0
    %687 = vmatpush1.msra.mxu0 0.0
    %688 = vmatprep.subr.mxu0 0.0
    %689 = vmatpush1.msra.mxu0 0.0
    %690 = vmatprep.subr.mxu0 0.0
    %691 = vmatpush1.msra.mxu0 0.0
    %692 = vmatprep.subr.mxu0 0.0
    %693 = vmatpush1.msra.mxu0 0.0
    %694 = vmatprep.subr.mxu0 0.0
    %695 = vmatpush1.msra.mxu0 0.0
    %696 = vmatprep.subr.mxu0 0.0
    %697 = vmatpush1.msra.mxu0 0.0
    %698 = vmatprep.subr.mxu0 0.0
    %699 = vmatpush1.msra.mxu0 0.0
    %700 = vmatprep.subr.mxu0 0.0
    %701 = vmatpush1.msra.mxu0 0.0
    %702 = vmatprep.subr.mxu0 0.0
    %703 = vmatpush1.msra.mxu0 0.0
    %704 = vmatprep.subr.mxu0 0.0
    %705 = vmatpush1.msra.mxu0 0.0
    %706 = vmatprep.subr.mxu0 0.0
    %707 = vmatpush1.msra.mxu0 0.0
    %708 = vmatprep.mubr.f32.mxu0 0.0
    %709 = vmatmul.mubr.f32.gmra.mrb[0].mxu0 %v642
    %v710 = vpop.f32.mrb[0].mxu0
    %v711 = vadd.f32 %v127, %v710
    %v712 = vpop.f32.mrb[0].mxu0
    %713 = vdwg.mxu0
    %v714 = vxor.u32 %v711, 2147483648
    %v715 = vmul.f32 %v714, 1.442695
    %v716 = vpow.pop %v715
    %v717 = vadd.f32 %v716, 1.0
    %v718 = vrcp.pop %v717
    %v719 = vmul.f32 1.0, %v718
    %v720 = vtanh.pop %v711
    %v721 = vmul.f32 %v719, %v580
    %723 = vrot.lane.b32.xlu0 %v720, 32
    %v724 = vpop.permute.xlu0 %723
    %v726 = vmul.f32 %v719, %v724
    %728 = vrot.lane.b32.xlu0 %v726, 32
    %v729 = vpop.permute.xlu0 %728
    %v731 = vadd.f32 %v721, %v729
    %v732 = vtanh.pop %v731
    %734 = vrot.lane.b32.xlu0 %v732, 32
    %v735 = vpop.permute.xlu0 %734
    %v737 = vmul.f32 %v719, %v735
    %v738 = vmul.f32 %v737, %v268
    %740 = vrot.lane.b32.xlu0 %v738, 64
    %v741 = vpop.permute.xlu0 %740
    %v743 = vsel %vm275, %v741, 0.0
    %744 = vadd.xlane.f32.xlu0 %v743
    %v745 = vpop.xlane.xlu0 %744
    %v746 = vadd.f32 %v745, %v291
    %v747 = vxor.u32 %v746, 2147483648
    %v748 = vmul.f32 %v747, 1.442695
    %v749 = vpow.pop %v748
    %v750 = vadd.f32 %v749, 1.0
    %v751 = vrcp.pop %v750
    %v752 = vmul.f32 1.0, %v751
    %v753 = vlaneseq
    %v754 = vshrl.u32 %v753, 7
    %v755 = vsub.s32 0, %v754
    %v756 = vrot.slane %v752, %v755
    %758 = vbcast.lane.b32.xlu0 %v756, 256
    %v759 = vpop.permute.xlu0 %758
    %v760 = vlaneseq
    %v761 = vshrl.u32 %v760, 7
    %v762 = vsub.s32 1, %v761
    %v763 = vrot.slane %v752, %v762
    %765 = vbcast.lane.b32.xlu0 %v763, 256
    %v766 = vpop.permute.xlu0 %765
    %v767 = vmul.f32 %v759, %v115
    %v768 = vmul.f32 %v766, %v116
    %v769 = vsel %vm83, %v767, 0.0
    %v770 = vrot.slane %v769, 4
    %v771 = vadd.f32 %v769, %v770
    %v772 = vrot.slane %v771, 2
    %v773 = vadd.f32 %v771, %v772
    %v774 = vrot.slane %v773, 1
    %v775 = vadd.f32 %v773, %v774
    %v776 = vsel %vm83, %v768, 0.0
    %v777 = vrot.slane %v776, 4
    %v778 = vadd.f32 %v776, %v777
    %v779 = vrot.slane %v778, 2
    %v780 = vadd.f32 %v778, %v779
    %v781 = vrot.slane %v780, 1
    %v782 = vadd.f32 %v780, %v781
    %v785 = vsel %vm165, %v782, %v775
    %788 = vrot.lane.b32.xlu0 %v737, 96
    %v789 = vpop.permute.xlu0 %788
    %v791 = vsel %vm83, %v785, %v789
    %v793 = vsel %vm169, %v791, 0
    %795 = vmatprep.subr.mxu0 0.0
    %796 = vmatpush1.msra.mxu0 %v66
    %797 = vmatprep.subr.mxu0 0.0
    %798 = vmatpush1.msra.mxu0 %v67
    %799 = vmatprep.subr.mxu0 0.0
    %800 = vmatpush1.msra.mxu0 %v68
    %801 = vmatprep.subr.mxu0 0.0
    %802 = vmatpush1.msra.mxu0 %v69
    %803 = vmatprep.subr.mxu0 0.0
    %804 = vmatpush1.msra.mxu0 %v70
    %805 = vmatprep.subr.mxu0 0.0
    %806 = vmatpush1.msra.mxu0 %v71
    %807 = vmatprep.subr.mxu0 0.0
    %808 = vmatpush1.msra.mxu0 %v72
    %809 = vmatprep.subr.mxu0 0.0
    %810 = vmatpush1.msra.mxu0 %v73
    %811 = vmatprep.subr.mxu0 0.0
    %812 = vmatpush1.msra.mxu0 0.0
    %813 = vmatprep.subr.mxu0 0.0
    %814 = vmatpush1.msra.mxu0 0.0
    %815 = vmatprep.subr.mxu0 0.0
    %816 = vmatpush1.msra.mxu0 0.0
    %817 = vmatprep.subr.mxu0 0.0
    %818 = vmatpush1.msra.mxu0 0.0
    %819 = vmatprep.subr.mxu0 0.0
    %820 = vmatpush1.msra.mxu0 0.0
    %821 = vmatprep.subr.mxu0 0.0
    %822 = vmatpush1.msra.mxu0 0.0
    %823 = vmatprep.subr.mxu0 0.0
    %824 = vmatpush1.msra.mxu0 0.0
    %825 = vmatprep.subr.mxu0 0.0
    %826 = vmatpush1.msra.mxu0 0.0
    %827 = vmatprep.subr.mxu0 0.0
    %828 = vmatpush1.msra.mxu0 0.0
    %829 = vmatprep.subr.mxu0 0.0
    %830 = vmatpush1.msra.mxu0 0.0
    %831 = vmatprep.subr.mxu0 0.0
    %832 = vmatpush1.msra.mxu0 0.0
    %833 = vmatprep.subr.mxu0 0.0
    %834 = vmatpush1.msra.mxu0 0.0
    %835 = vmatprep.subr.mxu0 0.0
    %836 = vmatpush1.msra.mxu0 0.0
    %837 = vmatprep.subr.mxu0 0.0
    %838 = vmatpush1.msra.mxu0 0.0
    %839 = vmatprep.subr.mxu0 0.0
    %840 = vmatpush1.msra.mxu0 0.0
    %841 = vmatprep.subr.mxu0 0.0
    %842 = vmatpush1.msra.mxu0 0.0
    %843 = vmatprep.subr.mxu0 0.0
    %844 = vmatpush1.msra.mxu0 0.0
    %845 = vmatprep.subr.mxu0 0.0
    %846 = vmatpush1.msra.mxu0 0.0
    %847 = vmatprep.subr.mxu0 0.0
    %848 = vmatpush1.msra.mxu0 0.0
    %849 = vmatprep.subr.mxu0 0.0
    %850 = vmatpush1.msra.mxu0 0.0
    %851 = vmatprep.subr.mxu0 0.0
    %852 = vmatpush1.msra.mxu0 0.0
    %853 = vmatprep.subr.mxu0 0.0
    %854 = vmatpush1.msra.mxu0 0.0
    %855 = vmatprep.subr.mxu0 0.0
    %856 = vmatpush1.msra.mxu0 0.0
    %857 = vmatprep.subr.mxu0 0.0
    %858 = vmatpush1.msra.mxu0 0.0
    %859 = vmatprep.mubr.f32.mxu0 0.0
    %860 = vmatmul.mubr.f32.gmra.mrb[0].mxu0 %v793
    %v861 = vpop.f32.mrb[0].mxu0
    %v862 = vadd.f32 %v127, %v861
    %v863 = vpop.f32.mrb[0].mxu0
    %864 = vdwg.mxu0
    %v865 = vxor.u32 %v862, 2147483648
    %v866 = vmul.f32 %v865, 1.442695
    %v867 = vpow.pop %v866
    %v868 = vadd.f32 %v867, 1.0
    %v869 = vrcp.pop %v868
    %v870 = vmul.f32 1.0, %v869
    %v871 = vtanh.pop %v862
    %v872 = vmul.f32 %v870, %v731
    %874 = vrot.lane.b32.xlu0 %v871, 32
    %v875 = vpop.permute.xlu0 %874
    %v877 = vmul.f32 %v870, %v875
    %879 = vrot.lane.b32.xlu0 %v877, 32
    %v880 = vpop.permute.xlu0 %879
    %v882 = vadd.f32 %v872, %v880
    %v883 = vtanh.pop %v882
    %885 = vrot.lane.b32.xlu0 %v883, 32
    %v886 = vpop.permute.xlu0 %885
    %v888 = vmul.f32 %v870, %v886
    %v889 = vmul.f32 %v888, %v268
    %891 = vrot.lane.b32.xlu0 %v889, 64
    %v892 = vpop.permute.xlu0 %891
    %v894 = vsel %vm275, %v892, 0.0
    %895 = vadd.xlane.f32.xlu0 %v894
    %v896 = vpop.xlane.xlu0 %895
    %v897 = vadd.f32 %v896, %v291
    %v898 = vxor.u32 %v897, 2147483648
    %v899 = vmul.f32 %v898, 1.442695
    %v900 = vpow.pop %v899
    %v901 = vadd.f32 %v900, 1.0
    %v902 = vrcp.pop %v901
    %v903 = vmul.f32 1.0, %v902
    %v904 = vlaneseq
    %v905 = vshrl.u32 %v904, 7
    %v906 = vsub.s32 0, %v905
    %v907 = vrot.slane %v903, %v906
    %909 = vbcast.lane.b32.xlu0 %v907, 256
    %v910 = vpop.permute.xlu0 %909
    %v911 = vlaneseq
    %v912 = vshrl.u32 %v911, 7
    %v913 = vsub.s32 1, %v912
    %v914 = vrot.slane %v903, %v913
    %916 = vbcast.lane.b32.xlu0 %v914, 256
    %v917 = vpop.permute.xlu0 %916
    %v918 = vmul.f32 %v910, %v115
    %v919 = vmul.f32 %v917, %v116
    %v920 = vsel %vm83, %v918, 0.0
    %v921 = vrot.slane %v920, 4
    %v922 = vadd.f32 %v920, %v921
    %v923 = vrot.slane %v922, 2
    %v924 = vadd.f32 %v922, %v923
    %v925 = vrot.slane %v924, 1
    %v926 = vadd.f32 %v924, %v925
    %v927 = vsel %vm83, %v919, 0.0
    %v928 = vrot.slane %v927, 4
    %v929 = vadd.f32 %v927, %v928
    %v930 = vrot.slane %v929, 2
    %v931 = vadd.f32 %v929, %v930
    %v932 = vrot.slane %v931, 1
    %v933 = vadd.f32 %v931, %v932
    %v936 = vsel %vm165, %v933, %v926
    %939 = vrot.lane.b32.xlu0 %v888, 96
    %v940 = vpop.permute.xlu0 %939
    %v942 = vsel %vm83, %v936, %v940
    %v944 = vsel %vm169, %v942, 0
    %946 = vmatprep.subr.mxu0 0.0
    %947 = vmatpush1.msra.mxu0 %v66
    %948 = vmatprep.subr.mxu0 0.0
    %949 = vmatpush1.msra.mxu0 %v67
    %950 = vmatprep.subr.mxu0 0.0
    %951 = vmatpush1.msra.mxu0 %v68
    %952 = vmatprep.subr.mxu0 0.0
    %953 = vmatpush1.msra.mxu0 %v69
    %954 = vmatprep.subr.mxu0 0.0
    %955 = vmatpush1.msra.mxu0 %v70
    %956 = vmatprep.subr.mxu0 0.0
    %957 = vmatpush1.msra.mxu0 %v71
    %958 = vmatprep.subr.mxu0 0.0
    %959 = vmatpush1.msra.mxu0 %v72
    %960 = vmatprep.subr.mxu0 0.0
    %961 = vmatpush1.msra.mxu0 %v73
    %962 = vmatprep.subr.mxu0 0.0
    %963 = vmatpush1.msra.mxu0 0.0
    %964 = vmatprep.subr.mxu0 0.0
    %965 = vmatpush1.msra.mxu0 0.0
    %966 = vmatprep.subr.mxu0 0.0
    %967 = vmatpush1.msra.mxu0 0.0
    %968 = vmatprep.subr.mxu0 0.0
    %969 = vmatpush1.msra.mxu0 0.0
    %970 = vmatprep.subr.mxu0 0.0
    %971 = vmatpush1.msra.mxu0 0.0
    %972 = vmatprep.subr.mxu0 0.0
    %973 = vmatpush1.msra.mxu0 0.0
    %974 = vmatprep.subr.mxu0 0.0
    %975 = vmatpush1.msra.mxu0 0.0
    %976 = vmatprep.subr.mxu0 0.0
    %977 = vmatpush1.msra.mxu0 0.0
    %978 = vmatprep.subr.mxu0 0.0
    %979 = vmatpush1.msra.mxu0 0.0
    %980 = vmatprep.subr.mxu0 0.0
    %981 = vmatpush1.msra.mxu0 0.0
    %982 = vmatprep.subr.mxu0 0.0
    %983 = vmatpush1.msra.mxu0 0.0
    %984 = vmatprep.subr.mxu0 0.0
    %985 = vmatpush1.msra.mxu0 0.0
    %986 = vmatprep.subr.mxu0 0.0
    %987 = vmatpush1.msra.mxu0 0.0
    %988 = vmatprep.subr.mxu0 0.0
    %989 = vmatpush1.msra.mxu0 0.0
    %990 = vmatprep.subr.mxu0 0.0
    %991 = vmatpush1.msra.mxu0 0.0
    %992 = vmatprep.subr.mxu0 0.0
    %993 = vmatpush1.msra.mxu0 0.0
    %994 = vmatprep.subr.mxu0 0.0
    %995 = vmatpush1.msra.mxu0 0.0
    %996 = vmatprep.subr.mxu0 0.0
    %997 = vmatpush1.msra.mxu0 0.0
    %998 = vmatprep.subr.mxu0 0.0
    %999 = vmatpush1.msra.mxu0 0.0
    %1000 = vmatprep.subr.mxu0 0.0
    %1001 = vmatpush1.msra.mxu0 0.0
    %1002 = vmatprep.subr.mxu0 0.0
    %1003 = vmatpush1.msra.mxu0 0.0
    %1004 = vmatprep.subr.mxu0 0.0
    %1005 = vmatpush1.msra.mxu0 0.0
    %1006 = vmatprep.subr.mxu0 0.0
    %1007 = vmatpush1.msra.mxu0 0.0
    %1008 = vmatprep.subr.mxu0 0.0
    %1009 = vmatpush1.msra.mxu0 0.0
    %1010 = vmatprep.mubr.f32.mxu0 0.0
    %1011 = vmatmul.mubr.f32.gmra.mrb[0].mxu0 %v944
    %v1012 = vpop.f32.mrb[0].mxu0
    %v1013 = vadd.f32 %v127, %v1012
    %v1014 = vpop.f32.mrb[0].mxu0
    %1015 = vdwg.mxu0
    %v1016 = vxor.u32 %v1013, 2147483648
    %v1017 = vmul.f32 %v1016, 1.442695
    %v1018 = vpow.pop %v1017
    %v1019 = vadd.f32 %v1018, 1.0
    %v1020 = vrcp.pop %v1019
    %v1021 = vmul.f32 1.0, %v1020
    %v1022 = vtanh.pop %v1013
    %v1023 = vmul.f32 %v1021, %v882
    %1025 = vrot.lane.b32.xlu0 %v1022, 32
    %v1026 = vpop.permute.xlu0 %1025
    %v1028 = vmul.f32 %v1021, %v1026
    %1030 = vrot.lane.b32.xlu0 %v1028, 32
    %v1031 = vpop.permute.xlu0 %1030
    %v1033 = vadd.f32 %v1023, %v1031
    %v1034 = vtanh.pop %v1033
    %1036 = vrot.lane.b32.xlu0 %v1034, 32
    %v1037 = vpop.permute.xlu0 %1036
    %v1039 = vmul.f32 %v1021, %v1037
    %1041 = vrot.lane.b32.xlu0 %v1039, 64
    %v1042 = vpop.permute.xlu0 %1041
    %1044 = vst.msk [vmem:[#allocation8] sm:$0x3] %vm275, %v1042
    %1046 = vrot.lane.b32.xlu0 %v1033, 96
    %v1047 = vpop.permute.xlu0 %1046
    %1049 = vst.msk [vmem:[#allocation9] sm:$0x3] %vm275, %v1047
    // Predicated region
    $region38: #{tpu_custom_call.1} parent=1 // pred_check
      _
    $region39: #{tpu_custom_call.1} parent=1 // pred_check_branch
      %1051 = sbr.rel (0) target = $region41
    $region40: #{tpu_custom_call.1} parent=1 // pred_region
      %s1053 = ssub.s32 32, 32
      %1054 = vsyncadd [#allocation5], %s1053
      %s1056 = sshll.u32 [#allocation8], 4
      %s1057 = int_to_ptr.vmem [resolvable:$true] %s1056
      %1059 = dma.vmem_to_hbm [thread:$0]  %s1057, 32, %s7, [#allocation5]
    $region41: #{tpu_custom_call.1} parent=1 // pred_fallthru
      _
    // Predicated region
    $region42: #{tpu_custom_call.1} parent=1 // pred_check
      _
    $region43: #{tpu_custom_call.1} parent=1 // pred_check_branch
      %1061 = sbr.rel (0) target = $region45
    $region44: #{tpu_custom_call.1} parent=1 // pred_region
      %s1063 = ssub.s32 32, 32
      %1064 = vsyncadd [#allocation10], %s1063
      %s1066 = sshll.u32 [#allocation9], 4
      %s1067 = int_to_ptr.vmem [resolvable:$true] %s1066
      %1069 = dma.vmem_to_hbm [thread:$0]  %s1067, 32, %s8, [#allocation10]
    $region45: #{tpu_custom_call.1} parent=1 // pred_fallthru
      _
    // Predicated region
    $region46: #{tpu_custom_call.1} parent=1 // pred_check
      _
    $region47: #{tpu_custom_call.1} parent=1 // pred_check_branch
      %1071 = sbr.rel (0) target = $region49
    $region48: #{tpu_custom_call.1} parent=1 // pred_region
      %1072 = dma.done [#allocation5], 32
    $region49: #{tpu_custom_call.1} parent=1 // pred_fallthru
      _
    // Predicated region
    $region50: #{tpu_custom_call.1} parent=1 // pred_check
      _
    $region51: #{tpu_custom_call.1} parent=1 // pred_check_branch
      %1074 = sbr.rel (0) target = $region53
    $region52: #{tpu_custom_call.1} parent=1 // pred_region
      %1075 = dma.done [#allocation10], 32
    $region53: #{tpu_custom_call.1} parent=1 // pred_fallthru
      _
    %1076 = vsyncpa [#allocation4], 1
    %1077 = vsyncpa [#allocation7], 1
    %1078 = vsyncpa [#allocation5], 1
    %1079 = vsyncpa [#allocation10], 1

</llo_original>
